<compile_context>
chip_gen: v7x
topology: tpu7x:2x2x1
jax: 0.10.0
libtpu: 0.0.40
codegen_flags: <defaults>
</compile_context>

<pallas_src>
import functools

import jax
import jax.numpy as jnp
from jax.experimental import pallas as pl
from jax.experimental.pallas import tpu as pltpu


def _centroid_loss_kernel(a_ref, b_ref, o_ref, *, batch):
    """a_ref, b_ref: [2, N, TB] f32 (x/y, vertex, batch-lane).
    o_ref: [1, TB] f32 = per-polygon |d centroid_x| + |d centroid_y|
    (explicit 0 in padded lanes when batch is not None)."""
    n = a_ref.shape[1]
    tb = o_ref.shape[1]

    def centroid(ref):
        x = ref[0]                                   # [N, TB]
        y = ref[1]
        # next vertex == torch.roll(poly, -1, dims=1); a cyclic rotate by n-1
        # is the same permutation (and the centroid is invariant to the
        # roll direction anyway).  XLU sublane rotate.
        nx = pltpu.roll(x, shift=n - 1, axis=0)
        ny = pltpu.roll(y, shift=n - 1, axis=0)
        cross = x * ny - nx * y                                     # [N, TB]
        s_cross = jnp.sum(cross, axis=0, keepdims=True)             # [1, TB]
        s_cx = jnp.sum((x + nx) * cross, axis=0, keepdims=True)     # [1, TB]
        s_cy = jnp.sum((y + ny) * cross, axis=0, keepdims=True)     # [1, TB]
        # 6*area = 6 * 0.5 * sum_cross = 3 * sum_cross; one exact reciprocal
        # shared by cx and cy (torch-parity near tiny areas).
        inv = pl.reciprocal(3.0 * s_cross, approx=False)
        return s_cx * inv, s_cy * inv

    cax, cay = centroid(a_ref)      # a's [N,TB] planes go dead before b loads
    cbx, cby = centroid(b_ref)
    val = jnp.abs(cax - cbx) + jnp.abs(cay - cby)                   # [1, TB]

    if batch is None:
        # Batch is an exact multiple of the lane tile: no masking needed.
        o_ref[...] = val
    else:
        # Partial last block: input lanes past `batch` are undefined -> force
        # the corresponding output lanes to exactly 0 (wrapper sums the row).
        col = pl.program_id(0) * tb + jax.lax.broadcasted_iota(
            jnp.int32, (1, tb), 1)
        o_ref[...] = jnp.where(col < batch, val, 0.0)


def _pick_lane_tile(batch, n_vert):
    """Lane-tile heuristic: ~2 MiB per-input blocks, <= 8192 lanes, keep the
    double-buffered input footprint <= ~12 MiB (v5e scoped-VMEM safe), and keep
    >= 2 grid blocks once B >= 256 so v7x's two TensorCores split the work."""
    bytes_per_lane = 2 * n_vert * 4                    # one input, one column
    tb = (2 << 20) // bytes_per_lane                   # ~2 MiB per-input block
    tb = min(tb, (12 << 20) // (4 * bytes_per_lane))   # 2 inputs x 2 buffers
    tb = max(128, min(8192, (tb // 128) * 128))
    if batch >= 256:
        half = -(-batch // 2)
        tb = min(tb, max(128, ((half + 127) // 128) * 128))
    tb = min(tb, ((batch + 127) // 128) * 128)         # never exceed padded B
    return tb


def centroid_loss(a, b, *, lane_tile=None):
    """a, b: [B, N, 2] polygons. Returns scalar f32 loss (== PyTorch module)."""
    assert a.shape == b.shape and a.ndim == 3 and a.shape[-1] == 2
    B, N, _ = a.shape

    # Batch-minor layout [2(x/y), N, B]; no stack, no pad-concat.  With
    # allow_input_fusion XLA may fuse this transpose into the Pallas call
    # instead of materializing the transposed operands in HBM.
    at = jnp.transpose(a.astype(jnp.float32), (2, 1, 0))
    bt = jnp.transpose(b.astype(jnp.float32), (2, 1, 0))

    if lane_tile is None:
        tb = _pick_lane_tile(B, N)
    else:
        assert lane_tile % 128 == 0
        tb = lane_tile
    grid = pl.cdiv(B, tb)
    bp = grid * tb              # output is lane-padded; padded lanes get 0

    kernel = functools.partial(
        _centroid_loss_kernel, batch=None if bp == B else B)

    per_poly = pl.pallas_call(
        kernel,
        out_shape=jax.ShapeDtypeStruct((1, bp), jnp.float32),
        grid=(grid,),
        in_specs=[pl.BlockSpec((2, N, tb), lambda i: (0, 0, i)),
                  pl.BlockSpec((2, N, tb), lambda i: (0, 0, i))],
        out_specs=pl.BlockSpec((1, tb), lambda i: (0, i)),
        compiler_params=pltpu.CompilerParams(
            dimension_semantics=("parallel",),
            allow_input_fusion=[True, True],
            vmem_limit_bytes=32 * 1024 * 1024),
    )(at, bt)

    # mean over the [B, 2] centroid-diff tensor; padded lanes are exactly 0,
    # and the division is a compile-time-constant multiply.
    return jnp.sum(per_poly) * (1.0 / (2.0 * B))


# ----------------------------- pure-JAX reference ----------------------------
def _ref_loss(a, b):
    def centroid(p):
        nxt = jnp.roll(p, -1, axis=1)
        cross = p[..., 0] * nxt[..., 1] - nxt[..., 0] * p[..., 1]
        area = 0.5 * cross.sum(axis=1)
        cx = ((p[..., 0] + nxt[..., 0]) * cross).sum(axis=1) / (6.0 * area)
        cy = ((p[..., 1] + nxt[..., 1]) * cross).sum(axis=1) / (6.0 * area)
        return jnp.stack([cx, cy], axis=1)
    return jnp.abs(centroid(a) - centroid(b)).mean()


if __name__ == "__main__":
    key = jax.random.PRNGKey(0)

    def make_polys(k, batch, nvert):
        k1, k2 = jax.random.split(k)
        ang = jnp.linspace(0.0, 2.0 * jnp.pi, nvert, endpoint=False)
        radius = 1.0 + 0.3 * jax.random.uniform(k1, (batch, nvert))
        center = 2.0 * jax.random.normal(k2, (batch, 1, 2))
        pts = jnp.stack([radius * jnp.cos(ang), radius * jnp.sin(ang)], axis=-1)
        return (pts + center).astype(jnp.float32)

    ka, kb, kc, kd = jax.random.split(key, 4)
    loss_fn = jax.jit(centroid_loss, static_argnames=("lane_tile",))

    # case 1: small batch (B=8 -> single 128-lane block, masked padded lanes)
    a1, b1 = make_polys(ka, 8, 16), make_polys(kb, 8, 16)
    l1 = jax.block_until_ready(loss_fn(a1, b1))
    r1 = _ref_loss(a1, b1)
    assert jnp.allclose(l1, r1, rtol=1e-5, atol=1e-5), (l1, r1)

    # case 2: multi-block grid + partial last block (B=300, lane tile 128)
    a2, b2 = make_polys(kc, 300, 16), make_polys(kd, 300, 16)
    l2 = jax.block_until_ready(loss_fn(a2, b2, lane_tile=128))
    r2 = _ref_loss(a2, b2)
    assert jnp.allclose(l2, r2, rtol=1e-5, atol=1e-5), (l2, r2)

    print("KERNEL_OK")
</pallas_src>

<mosaic_0001>
module attributes {stable_mosaic.version = 11 : i64} {
  func.func @_centroid_loss_kernel(%arg0: i32, %arg1: memref<2x16x128xf32, #tpu.memory_space<vmem>>, %arg2: memref<2x16x128xf32, #tpu.memory_space<vmem>>, %arg3: memref<1x128xf32, #tpu.memory_space<vmem>>) attributes {dimension_semantics = [#tpu.dimension_semantics<parallel>], iteration_bounds = array<i64: 1>, scalar_prefetch = 0 : i64, scratch_operands = 0 : i64, tpu.core_type = #tpu.core_type<tc>, window_params = [{transform_indices = @transform_0, window_bounds = array<i64: 2, 16, 128>}, {transform_indices = @transform_1, window_bounds = array<i64: 2, 16, 128>}, {transform_indices = @transform_2, window_bounds = array<i64: 1, 128>}]} {
    %c0 = arith.constant 0 : index
    %c0_0 = arith.constant 0 : index
    %c0_1 = arith.constant 0 : index
    %0 = vector.load %arg1[%c0, %c0_0, %c0_1] : memref<2x16x128xf32, #tpu.memory_space<vmem>>, vector<1x16x128xf32>
    %1 = vector.shape_cast %0 : vector<1x16x128xf32> to vector<16x128xf32>
    %c1 = arith.constant 1 : index
    %c0_2 = arith.constant 0 : index
    %c0_3 = arith.constant 0 : index
    %2 = vector.load %arg1[%c1, %c0_2, %c0_3] : memref<2x16x128xf32, #tpu.memory_space<vmem>>, vector<1x16x128xf32>
    %3 = vector.shape_cast %2 : vector<1x16x128xf32> to vector<16x128xf32>
    %c15_i32 = arith.constant 15 : i32
    %4 = tpu.dynamic_rotate %1 by %c15_i32 dim 0 : vector<16x128xf32>, i32 -> vector<16x128xf32>
    %c15_i32_4 = arith.constant 15 : i32
    %5 = tpu.dynamic_rotate %3 by %c15_i32_4 dim 0 : vector<16x128xf32>, i32 -> vector<16x128xf32>
    %6 = arith.mulf %1, %5 : vector<16x128xf32>
    %7 = arith.mulf %4, %3 : vector<16x128xf32>
    %8 = arith.subf %6, %7 : vector<16x128xf32>
    %cst = arith.constant dense<0.000000e+00> : vector<128xf32>
    %9 = vector.multi_reduction <add>, %8, %cst [0] : vector<16x128xf32> to vector<128xf32>
    %10 = vector.shape_cast %9 : vector<128xf32> to vector<1x128xf32>
    %11 = arith.addf %1, %4 : vector<16x128xf32>
    %12 = arith.mulf %11, %8 : vector<16x128xf32>
    %cst_5 = arith.constant dense<0.000000e+00> : vector<128xf32>
    %13 = vector.multi_reduction <add>, %12, %cst_5 [0] : vector<16x128xf32> to vector<128xf32>
    %14 = vector.shape_cast %13 : vector<128xf32> to vector<1x128xf32>
    %15 = arith.addf %3, %5 : vector<16x128xf32>
    %16 = arith.mulf %15, %8 : vector<16x128xf32>
    %cst_6 = arith.constant dense<0.000000e+00> : vector<128xf32>
    %17 = vector.multi_reduction <add>, %16, %cst_6 [0] : vector<16x128xf32> to vector<128xf32>
    %18 = vector.shape_cast %17 : vector<128xf32> to vector<1x128xf32>
    %cst_7 = arith.constant 3.000000e+00 : f32
    %19 = vector.broadcast %cst_7 : f32 to vector<1x128xf32>
    %20 = arith.mulf %19, %10 : vector<1x128xf32>
    %21 = tpu.reciprocal %20 : vector<1x128xf32> -> vector<1x128xf32>
    %22 = arith.mulf %14, %21 : vector<1x128xf32>
    %23 = arith.mulf %18, %21 : vector<1x128xf32>
    %c0_8 = arith.constant 0 : index
    %c0_9 = arith.constant 0 : index
    %c0_10 = arith.constant 0 : index
    %24 = vector.load %arg2[%c0_8, %c0_9, %c0_10] : memref<2x16x128xf32, #tpu.memory_space<vmem>>, vector<1x16x128xf32>
    %25 = vector.shape_cast %24 : vector<1x16x128xf32> to vector<16x128xf32>
    %c1_11 = arith.constant 1 : index
    %c0_12 = arith.constant 0 : index
    %c0_13 = arith.constant 0 : index
    %26 = vector.load %arg2[%c1_11, %c0_12, %c0_13] : memref<2x16x128xf32, #tpu.memory_space<vmem>>, vector<1x16x128xf32>
    %27 = vector.shape_cast %26 : vector<1x16x128xf32> to vector<16x128xf32>
    %c15_i32_14 = arith.constant 15 : i32
    %28 = tpu.dynamic_rotate %25 by %c15_i32_14 dim 0 : vector<16x128xf32>, i32 -> vector<16x128xf32>
    %c15_i32_15 = arith.constant 15 : i32
    %29 = tpu.dynamic_rotate %27 by %c15_i32_15 dim 0 : vector<16x128xf32>, i32 -> vector<16x128xf32>
    %30 = arith.mulf %25, %29 : vector<16x128xf32>
    %31 = arith.mulf %28, %27 : vector<16x128xf32>
    %32 = arith.subf %30, %31 : vector<16x128xf32>
    %cst_16 = arith.constant dense<0.000000e+00> : vector<128xf32>
    %33 = vector.multi_reduction <add>, %32, %cst_16 [0] : vector<16x128xf32> to vector<128xf32>
    %34 = vector.shape_cast %33 : vector<128xf32> to vector<1x128xf32>
    %35 = arith.addf %25, %28 : vector<16x128xf32>
    %36 = arith.mulf %35, %32 : vector<16x128xf32>
    %cst_17 = arith.constant dense<0.000000e+00> : vector<128xf32>
    %37 = vector.multi_reduction <add>, %36, %cst_17 [0] : vector<16x128xf32> to vector<128xf32>
    %38 = vector.shape_cast %37 : vector<128xf32> to vector<1x128xf32>
    %39 = arith.addf %27, %29 : vector<16x128xf32>
    %40 = arith.mulf %39, %32 : vector<16x128xf32>
    %cst_18 = arith.constant dense<0.000000e+00> : vector<128xf32>
    %41 = vector.multi_reduction <add>, %40, %cst_18 [0] : vector<16x128xf32> to vector<128xf32>
    %42 = vector.shape_cast %41 : vector<128xf32> to vector<1x128xf32>
    %cst_19 = arith.constant 3.000000e+00 : f32
    %43 = vector.broadcast %cst_19 : f32 to vector<1x128xf32>
    %44 = arith.mulf %43, %34 : vector<1x128xf32>
    %45 = tpu.reciprocal %44 : vector<1x128xf32> -> vector<1x128xf32>
    %46 = arith.mulf %38, %45 : vector<1x128xf32>
    %47 = arith.mulf %42, %45 : vector<1x128xf32>
    %48 = arith.subf %22, %46 : vector<1x128xf32>
    %49 = math.absf %48 : vector<1x128xf32>
    %50 = arith.subf %23, %47 : vector<1x128xf32>
    %51 = math.absf %50 : vector<1x128xf32>
    %52 = arith.addf %49, %51 : vector<1x128xf32>
    %c128_i32 = arith.constant 128 : i32
    %53 = arith.muli %arg0, %c128_i32 : i32
    %54 = tpu.iota {dimensions = array<i32: 1>} : vector<1x128xi32>
    %55 = vector.broadcast %53 : i32 to vector<1x128xi32>
    %56 = arith.addi %55, %54 : vector<1x128xi32>
    %c8_i32 = arith.constant 8 : i32
    %57 = vector.broadcast %c8_i32 : i32 to vector<1x128xi32>
    %58 = arith.cmpi slt, %56, %57 : vector<1x128xi32>
    %cst_20 = arith.constant 0.000000e+00 : f32
    %59 = vector.broadcast %cst_20 : f32 to vector<1x128xf32>
    %60 = arith.select %58, %52, %59 : vector<1x128xi1>, vector<1x128xf32>
    %c0_21 = arith.constant 0 : index
    %c0_22 = arith.constant 0 : index
    %61 = vector.load %arg3[%c0_21, %c0_22] : memref<1x128xf32, #tpu.memory_space<vmem>>, vector<1x128xf32>
    tpu.vector_store %arg3[%c0_21, %c0_22], %60 {strides = array<i32>} : memref<1x128xf32, #tpu.memory_space<vmem>>, vector<1x128xf32>,
    return
  }
  func.func @transform_0(%arg0: i32) -> (i32, i32, i32) {
    %c0_i32 = arith.constant 0 : i32
    %c0_i32_0 = arith.constant 0 : i32
    %c0_i32_1 = arith.constant 0 : i32
    return %c0_i32, %c0_i32_0, %arg0 : i32, i32, i32
  }
  func.func @transform_1(%arg0: i32) -> (i32, i32, i32) {
    %c0_i32 = arith.constant 0 : i32
    %c0_i32_0 = arith.constant 0 : i32
    %c0_i32_1 = arith.constant 0 : i32
    return %c0_i32, %c0_i32_0, %arg0 : i32, i32, i32
  }
  func.func @transform_2(%arg0: i32) -> (i32, i32) {
    %c0_i32 = arith.constant 0 : i32
    %c0_i32_0 = arith.constant 0 : i32
    return %c0_i32, %arg0 : i32, i32
  }
}

</mosaic_0001>

<llo_original>
// kernel: centroid_loss.2
$region0: #{centroid_loss.2}
  #allocation0 [shape = 'u32[]', space=smem, size = 0x4, offset = 0x4, fixed_abs, tag = 'smem constant byte address 0x4 - core index']
  #allocation1 [shape = 'u32[144,128]{1,0:T(1,128)}', space=vmem, size = 0x12000, scoped, tag = 'internal scratch']
  %s0 = inlined_call_operand.vmem [shape: f32[8,16,2], index: 0, kind: input, shape index: {}]
  %s1 = inlined_call_operand.vmem [shape: f32[8,16,2], index: 1, kind: input, shape index: {}]
  %s2 = inlined_call_operand.vmem [shape: f32[1,128], index: 2, kind: output, shape index: {}]
  %s3 = sld [smem:[#allocation0]]
  $region18: #{centroid_loss.2} parent=0
    _
  %s5 = ssub.s32 1, %s3
  %s6 = scalar_select 0, %s5, %s3
  $region1: #{centroid_loss.2} parent=0
    #allocation2 [shape = 'u8[16384]{0}', space=vmem, size = 0x4000, dematerialized = true, scoped, tag = 'FusionAdapter Buffer %fusion.2 = f32[2,16,8]{2,1,0:T(8,128)} fusion(%param_1.2), kind=kLoop, calls=%fused_computation.2.clone, metadata={op_name="jit(centroid_loss)/transpose" stack_frame_id=8}']
    #allocation3 [shape = 'u8[16384]{0}', space=vmem, size = 0x4000, dematerialized = true, scoped, tag = 'FusionAdapter Buffer %fusion.1 = f32[2,16,8]{2,1,0:T(8,128)} fusion(%param_0.2), kind=kLoop, calls=%fused_computation.1.clone, metadata={op_name="jit(centroid_loss)/transpose" stack_frame_id=9}']
    // Predicated region
    $region2: #{centroid_loss.2} parent=1 // pred_check
      _
    $region3: #{centroid_loss.2} parent=1 // pred_check_branch
      %8 = sbr.rel (0) target = $region5
    $region4: #{centroid_loss.2} parent=1 // pred_region
      _
    $region5: #{centroid_loss.2} parent=1 // pred_fallthru
      _
    // Predicated region
    $region6: #{centroid_loss.2} parent=1 // pred_check
      _
    $region7: #{centroid_loss.2} parent=1 // pred_check_branch
      %10 = sbr.rel (0) target = $region9
    $region8: #{centroid_loss.2} parent=1 // pred_region
      _
    $region9: #{centroid_loss.2} parent=1 // pred_fallthru
      _
    %v11 = vld [vmem:[%s1] sm:$0xff]
    %13 = vst [vmem:[#allocation2] sm:$0xff] %v11
    %s14 = scalar_lea.vmem %s1, 8
    %v15 = vld [vmem:[%s14] sm:$0xff]
    %s16 = scalar_lea.vmem [#allocation2], 8
    %18 = vst [vmem:[%s16] sm:$0xff] %v15
    %s19 = scalar_lea.vmem %s1, 16
    %v20 = vld [vmem:[%s19] sm:$0xff]
    %s21 = scalar_lea.vmem [#allocation2], 16
    %23 = vst [vmem:[%s21] sm:$0xff] %v20
    %s24 = scalar_lea.vmem %s1, 24
    %v25 = vld [vmem:[%s24] sm:$0xff]
    %s26 = scalar_lea.vmem [#allocation2], 24
    %28 = vst [vmem:[%s26] sm:$0xff] %v25
    %v29 = vld [vmem:[%s0] sm:$0xff]
    %31 = vst [vmem:[#allocation3] sm:$0xff] %v29
    %s32 = scalar_lea.vmem %s0, 8
    %v33 = vld [vmem:[%s32] sm:$0xff]
    %s34 = scalar_lea.vmem [#allocation3], 8
    %36 = vst [vmem:[%s34] sm:$0xff] %v33
    %s37 = scalar_lea.vmem %s0, 16
    %v38 = vld [vmem:[%s37] sm:$0xff]
    %s39 = scalar_lea.vmem [#allocation3], 16
    %41 = vst [vmem:[%s39] sm:$0xff] %v38
    %s42 = scalar_lea.vmem %s0, 24
    %v43 = vld [vmem:[%s42] sm:$0xff]
    %s44 = scalar_lea.vmem [#allocation3], 24
    %46 = vst [vmem:[%s44] sm:$0xff] %v43
    %v47 = vld [vmem:[#allocation2] sm:$0xff]
    %v48 = vld [vmem:[#allocation2 + $0x8] sm:$0xff]
    %s49 = scalar_lea.vmem [#allocation2], 16
    %v50 = vld [vmem:[%s49] sm:$0xff]
    %v51 = vld [vmem:[%s49 + $0x8] sm:$0xff]
    %v52 = vrot.slane %v47, 1
    %v53 = vrot.slane %v48, 1
    %v54 = vlaneseq
    %v55 = vshrl.u32 %v54, 7
    %vm56 = vcmp.lt.s32.totalorder %v55, 7
    %v57 = vsel %vm56, %v52, %v53
    %v58 = vsel %vm56, %v53, %v52
    %v59 = vrot.slane %v50, 1
    %v60 = vrot.slane %v51, 1
    %v61 = vsel %vm56, %v59, %v60
    %v62 = vsel %vm56, %v60, %v59
    %v63 = vmul.f32 %v47, %v61
    %v64 = vmul.f32 %v48, %v62
    %v65 = vmul.f32 %v57, %v50
    %v66 = vmul.f32 %v58, %v51
    %v67 = vsub.f32 %v63, %v65
    %v68 = vsub.f32 %v64, %v66
    %v69 = vadd.f32 %v67, %v68
    %v70 = vrot.slane %v69, 4
    %v71 = vadd.f32 %v69, %v70
    %v72 = vrot.slane %v71, 2
    %v73 = vadd.f32 %v71, %v72
    %v74 = vrot.slane %v73, 1
    %v75 = vadd.f32 %v73, %v74
    %v76 = vadd.f32 %v47, %v57
    %v77 = vadd.f32 %v48, %v58
    %v78 = vmul.f32 %v76, %v67
    %v79 = vmul.f32 %v77, %v68
    %v80 = vadd.f32 %v78, %v79
    %v81 = vrot.slane %v80, 4
    %v82 = vadd.f32 %v80, %v81
    %v83 = vrot.slane %v82, 2
    %v84 = vadd.f32 %v82, %v83
    %v85 = vrot.slane %v84, 1
    %v86 = vadd.f32 %v84, %v85
    %v87 = vadd.f32 %v50, %v61
    %v88 = vadd.f32 %v51, %v62
    %v89 = vmul.f32 %v87, %v67
    %v90 = vmul.f32 %v88, %v68
    %v91 = vadd.f32 %v89, %v90
    %v92 = vrot.slane %v91, 4
    %v93 = vadd.f32 %v91, %v92
    %v94 = vrot.slane %v93, 2
    %v95 = vadd.f32 %v93, %v94
    %v96 = vrot.slane %v95, 1
    %v97 = vadd.f32 %v95, %v96
    %v98 = vmul.f32 %v75, 3.0
    %v99 = vrcp.pop %v98
    %v100 = vmul.f32 %v86, %v99
    %v101 = vmul.f32 %v97, %v99
    %v102 = vld [vmem:[#allocation3] sm:$0xff]
    %v103 = vld [vmem:[#allocation3 + $0x8] sm:$0xff]
    %s104 = scalar_lea.vmem [#allocation3], 16
    %v105 = vld [vmem:[%s104] sm:$0xff]
    %v106 = vld [vmem:[%s104 + $0x8] sm:$0xff]
    %v107 = vrot.slane %v102, 1
    %v108 = vrot.slane %v103, 1
    %v109 = vsel %vm56, %v107, %v108
    %v110 = vsel %vm56, %v108, %v107
    %v111 = vrot.slane %v105, 1
    %v112 = vrot.slane %v106, 1
    %v113 = vsel %vm56, %v111, %v112
    %v114 = vsel %vm56, %v112, %v111
    %v115 = vmul.f32 %v102, %v113
    %v116 = vmul.f32 %v103, %v114
    %v117 = vmul.f32 %v109, %v105
    %v118 = vmul.f32 %v110, %v106
    %v119 = vsub.f32 %v115, %v117
    %v120 = vsub.f32 %v116, %v118
    %v121 = vadd.f32 %v119, %v120
    %v122 = vrot.slane %v121, 4
    %v123 = vadd.f32 %v121, %v122
    %v124 = vrot.slane %v123, 2
    %v125 = vadd.f32 %v123, %v124
    %v126 = vrot.slane %v125, 1
    %v127 = vadd.f32 %v125, %v126
    %v128 = vadd.f32 %v102, %v109
    %v129 = vadd.f32 %v103, %v110
    %v130 = vmul.f32 %v128, %v119
    %v131 = vmul.f32 %v129, %v120
    %v132 = vadd.f32 %v130, %v131
    %v133 = vrot.slane %v132, 4
    %v134 = vadd.f32 %v132, %v133
    %v135 = vrot.slane %v134, 2
    %v136 = vadd.f32 %v134, %v135
    %v137 = vrot.slane %v136, 1
    %v138 = vadd.f32 %v136, %v137
    %v139 = vadd.f32 %v105, %v113
    %v140 = vadd.f32 %v106, %v114
    %v141 = vmul.f32 %v139, %v119
    %v142 = vmul.f32 %v140, %v120
    %v143 = vadd.f32 %v141, %v142
    %v144 = vrot.slane %v143, 4
    %v145 = vadd.f32 %v143, %v144
    %v146 = vrot.slane %v145, 2
    %v147 = vadd.f32 %v145, %v146
    %v148 = vrot.slane %v147, 1
    %v149 = vadd.f32 %v147, %v148
    %v150 = vmul.f32 %v127, 3.0
    %v151 = vrcp.pop %v150
    %v152 = vmul.f32 %v138, %v151
    %v153 = vmul.f32 %v149, %v151
    %v154 = vsub.f32 %v100, %v152
    %v155 = vand.u32 2147483647, %v154
    %v156 = vsub.f32 %v101, %v153
    %v157 = vand.u32 2147483647, %v156
    %v158 = vadd.f32 %v155, %v157
    %s159 = smul.u32 0, 128
    %v160 = vlaneseq
    %v161 = vand.u32 %v160, 127
    %v162 = vstv %s159
    %v163 = vadd.s32 %v162, %v161
    %vm164 = vcmp.lt.s32.totalorder %v163, 8
    %v165 = vsel %vm164, %v158, 0.0
    %166 = vst [vmem:[%s2] sm:$0x1] %v165
    // Predicated region
    $region10: #{centroid_loss.2} parent=1 // pred_check
      _
    $region11: #{centroid_loss.2} parent=1 // pred_check_branch
      %168 = sbr.rel (0) target = $region13
    $region12: #{centroid_loss.2} parent=1 // pred_region
      _
    $region13: #{centroid_loss.2} parent=1 // pred_fallthru
      _
    // Predicated region
    $region14: #{centroid_loss.2} parent=1 // pred_check
      _
    $region15: #{centroid_loss.2} parent=1 // pred_check_branch
      %170 = sbr.rel (0) target = $region17
    $region16: #{centroid_loss.2} parent=1 // pred_region
      _
    $region17: #{centroid_loss.2} parent=1 // pred_fallthru
      _

</llo_original>
